<compile_context>
chip_gen: v6e
topology: v6e:2x2x1
jax: 0.10.0
libtpu: 0.0.40
codegen_flags: <defaults>
</compile_context>

<pallas_src>
import jax
import jax.numpy as jnp
from jax.experimental import pallas as pl
from jax.experimental.pallas import tpu as pltpu

# ---------------------------------------------------------------------------
# Problem sizes (small, deterministic)
# ---------------------------------------------------------------------------
N = 2              # batch
C_IN = 4           # image channels
C_PAD = 8          # image channels padded to a full sublane group
H = W = 16         # spatial
HW = H * W
NHW_T = N * HW     # lane-stacked batch width (both images side by side)
C_FEAT = 32        # backbone output channels
R = 8              # proposals per image
NUM_CLASSES = 8
LANE = 128
HEAD_P = 3 * LANE  # fused head output width: [cls | det | obj], each 128 lanes
K_STACK = 9 * C_PAD
NEG_INF = -1e30


# ---------------------------------------------------------------------------
# Fused kernel: 3x3 conv (+folded normalization) + ReLU -> ROI mean pool ->
#               WSDDN two-branch head -> lane-dense packed output
# ---------------------------------------------------------------------------
def _fused_rcnn_wsl_kernel(x_ref, smask_ref, wstk_ref, post_ref,
                           rmask_ref, whead_ref, bhead_ref, out_ref):
    # ---- backbone: 3x3 conv (stride 1, zero pad 1) as one stacked matmul ----
    # x_ref: (C_PAD, N*HW) raw pixels, both images stacked along lanes.
    x = x_ref[...]
    taps = []
    for kk in range(9):                                   # static unroll
        di = kk // 3 - 1
        dj = kk % 3 - 1
        shift = di * W + dj                               # tap wants x[:, p+shift]
        if shift == 0:
            taps.append(x)
        else:
            # pltpu.roll == jnp.roll: out[p] = x[(p - s) mod n]; s = -shift gives
            # out[p] = x[(p + shift) mod n].  Wrapped / cross-image reads land
            # exactly on out-of-bounds taps and are zeroed by the host mask.
            taps.append(pltpu.roll(x, shift=(-shift) % NHW_T, axis=1))
    # (9*C_PAD, N*HW) stacked taps, boundary-masked by a precomputed constant.
    x_stack = jnp.concatenate(taps, axis=0) * smask_ref[...]
    # Single stacked-K matmul; post_ref carries conv bias + boundary-aware
    # mean-subtraction correction (normalization folded into the weights).
    feat = jnp.dot(wstk_ref[...], x_stack, preferred_element_type=jnp.float32)
    feat = jnp.maximum(feat + post_ref[...], 0.0)          # (C_FEAT, N*HW)

    # ---- ROI mean pooling: block-diagonal mean-pool matrix ------------------
    # (N*R, N*HW) x (C_FEAT, N*HW) -> (N*R, C_FEAT)
    pooled = jax.lax.dot_general(
        rmask_ref[...], feat,
        dimension_numbers=(((1,), (1,)), ((), ())),
        preferred_element_type=jnp.float32)

    # ---- WSDDN-style two-branch head, per image (static unroll) -------------
    w_head = whead_ref[...]
    b_head = bhead_ref[...]
    for n in range(N):
        logits = jnp.dot(pooled[n * R:(n + 1) * R, :], w_head,
                         preferred_element_type=jnp.float32) + b_head  # (R, 384)
        cls_logits = logits[:, 0 * LANE:1 * LANE]   # pad lanes biased to -1e30
        det_logits = logits[:, 1 * LANE:2 * LANE]   # pad lane columns harmless
        obj_logits = logits[:, 2 * LANE:3 * LANE]   # objectness at lane 0

        # softmax over classes (lanes); padded class lanes -> exactly 0
        e_c = jnp.exp(cls_logits - jnp.max(cls_logits, axis=-1, keepdims=True))
        cls_sm = e_c / jnp.sum(e_c, axis=-1, keepdims=True)
        # softmax over this image's proposals (rows); lanes independent
        e_d = jnp.exp(det_logits - jnp.max(det_logits, axis=0, keepdims=True))
        det_sm = e_d / jnp.sum(e_d, axis=0, keepdims=True)

        scores = cls_sm * det_sm                               # (R, 128)
        img_scores = jnp.sum(scores, axis=0, keepdims=True)    # (1, 128)

        # direct lane-dense stores: rows [0,NR) scores, [NR,2NR) objectness,
        # rows [2NR, 2NR+N) image-level scores.
        out_ref[n * R:(n + 1) * R, :] = scores
        out_ref[N * R + n * R:N * R + (n + 1) * R, :] = obj_logits
        out_ref[2 * N * R + n:2 * N * R + n + 1, :] = img_scores


# ---------------------------------------------------------------------------
# Host-side constants: fixed-grid proposals + row-normalized box masks
# ---------------------------------------------------------------------------
def make_grid_proposals(h, w, rows=2, cols=4):
    boxes = []
    bh, bw = h // rows, w // cols
    for i in range(rows):
        for j in range(cols):
            boxes.append([j * bw, i * bh, (j + 1) * bw, (i + 1) * bh])
    return jnp.asarray(boxes, dtype=jnp.float32)                 # (R, 4)


def boxes_to_masks(boxes, h, w):
    r = boxes.shape[0]
    ys = jnp.arange(h, dtype=jnp.float32).reshape(1, h, 1)
    xs = jnp.arange(w, dtype=jnp.float32).reshape(1, 1, w)
    x1 = boxes[:, 0].reshape(r, 1, 1)
    y1 = boxes[:, 1].reshape(r, 1, 1)
    x2 = boxes[:, 2].reshape(r, 1, 1)
    y2 = boxes[:, 3].reshape(r, 1, 1)
    inside = (ys >= y1) & (ys < y2) & (xs >= x1) & (xs < x2)
    mask = inside.astype(jnp.float32).reshape(r, h * w)
    mask = mask / jnp.maximum(jnp.sum(mask, axis=-1, keepdims=True), 1.0)
    return mask                                                  # (R, HW)


def _tap_validity(n):
    """(9, n*HW) f32 validity of each 3x3 tap at every (image, pixel)."""
    pos = jnp.arange(n * HW) % HW
    hh = pos // W
    ww = pos % W
    vs = []
    for kk in range(9):
        di = kk // 3 - 1
        dj = kk % 3 - 1
        v = ((hh + di >= 0) & (hh + di < H) & (ww + dj >= 0) & (ww + dj < W))
        vs.append(v.astype(jnp.float32))
    return jnp.stack(vs, axis=0)


# ---------------------------------------------------------------------------
# Full forward (inference semantics of GeneralizedRCNNWSL)
# ---------------------------------------------------------------------------
def generalized_rcnn_wsl_forward(images_nchw, params):
    n = images_nchw.shape[0]
    assert n == N
    k = NUM_CLASSES

    # ---- host-side constant folding (all grid-invariant work hoisted) -------
    inv_std = (1.0 / params["pixel_std"]).reshape(C_IN)          # (C_IN,)
    mean = params["pixel_mean"].reshape(C_IN)                    # (C_IN,)

    # conv taps with inv_std folded, channel-padded 4 -> 8, torch (O,I,kh,kw)
    w_taps = params["conv_w"].transpose(2, 3, 0, 1).reshape(9, C_FEAT, C_IN)
    w_taps = w_taps * inv_std.reshape(1, 1, C_IN)
    w_taps = jnp.pad(w_taps, ((0, 0), (0, 0), (0, C_PAD - C_IN)))      # (9,32,8)
    w_stack = jnp.transpose(w_taps, (1, 0, 2)).reshape(C_FEAT, K_STACK)  # (32,72)

    # per-tap boundary validity over the lane-stacked batch, one row per K row
    valid = _tap_validity(n)                                     # (9, n*HW)
    stack_mask = jnp.repeat(valid, C_PAD, axis=0)                # (72, n*HW)

    # boundary-aware post-conv correction: folds mean subtraction + conv bias
    mean_pad = jnp.pad(mean, (0, C_PAD - C_IN))                  # (8,)
    wm = jnp.einsum('koc,c->ko', w_taps, mean_pad)               # (9, C_FEAT)
    corr = jnp.einsum('ko,kp->op', wm, valid)                    # (C_FEAT, n*HW)
    post_map = params["conv_b"].reshape(C_FEAT, 1) - corr        # (32, n*HW)

    # raw images, channel-padded, batch stacked along lanes
    x = images_nchw.reshape(n, C_IN, HW)
    x = jnp.pad(x, ((0, 0), (0, C_PAD - C_IN), (0, 0)))
    x = jnp.transpose(x, (1, 0, 2)).reshape(C_PAD, n * HW)       # (8, n*HW)

    # fixed grid proposals + block-diagonal ROI mean-pool matrix
    boxes = make_grid_proposals(H, W)                            # (R, 4)
    base_mask = boxes_to_masks(boxes, H, W)                      # (R, HW)
    roi_mask = jnp.kron(jnp.eye(n, dtype=jnp.float32), base_mask)  # (n*R, n*HW)

    # fused, lane-padded head weights: [cls | det | obj]
    w_head = jnp.concatenate([
        jnp.pad(params["w_cls"], ((0, 0), (0, LANE - k))),
        jnp.pad(params["w_det"], ((0, 0), (0, LANE - k))),
        jnp.pad(params["w_obj"], ((0, 0), (0, LANE - 1))),
    ], axis=1)                                                   # (32, 384)
    b_head = jnp.concatenate([
        jnp.concatenate([params["b_cls"],
                         jnp.full((1, LANE - k), NEG_INF, jnp.float32)], axis=1),
        jnp.pad(params["b_det"], ((0, 0), (0, LANE - k))),
        jnp.pad(params["b_obj"], ((0, 0), (0, LANE - 1))),
    ], axis=1)                                                   # (1, 384)

    out_rows = 2 * n * R + n
    packed = pl.pallas_call(
        _fused_rcnn_wsl_kernel,
        out_shape=jax.ShapeDtypeStruct((out_rows, LANE), jnp.float32),
        grid=(1,),
        in_specs=[
            pl.BlockSpec((C_PAD, n * HW), lambda i: (0, 0)),      # raw images
            pl.BlockSpec((K_STACK, n * HW), lambda i: (0, 0)),    # tap masks
            pl.BlockSpec((C_FEAT, K_STACK), lambda i: (0, 0)),    # stacked conv W
            pl.BlockSpec((C_FEAT, n * HW), lambda i: (0, 0)),     # post-conv map
            pl.BlockSpec((n * R, n * HW), lambda i: (0, 0)),      # ROI pool matrix
            pl.BlockSpec((C_FEAT, HEAD_P), lambda i: (0, 0)),     # fused head W
            pl.BlockSpec((1, HEAD_P), lambda i: (0, 0)),          # fused head b
        ],
        out_specs=pl.BlockSpec((out_rows, LANE), lambda i: (0, 0)),
        compiler_params=pltpu.CompilerParams(
            dimension_semantics=("arbitrary",)),
    )(x, stack_mask, w_stack, post_map, roi_mask, w_head, b_head)

    # unpack the lane-dense slab in the wrapper
    scores = packed[0:n * R].reshape(n, R, LANE)[:, :, :k]        # (N, R, K)
    obj = packed[n * R:2 * n * R, 0].reshape(n, R)                # (N, R)
    img_scores = packed[2 * n * R:, :k]                           # (N, K)
    pred_boxes = jnp.broadcast_to(boxes[None], (n, R, 4))

    return {
        "scores": scores,                        # per-proposal WSDDN scores
        "image_scores": img_scores,              # image-level classification
        "objectness_logits": obj,                # proposal objectness
        "pred_boxes": pred_boxes,                # fixed grid proposals
    }


# ---------------------------------------------------------------------------
# Pure-JAX reference of the same simplified forward (for numerical check)
# ---------------------------------------------------------------------------
def reference_forward(images, params):
    mean = params["pixel_mean"].reshape(1, C_IN, 1, 1)
    std = params["pixel_std"].reshape(1, C_IN, 1, 1)
    xn = (images - mean) / std
    feat = jax.lax.conv_general_dilated(
        xn, params["conv_w"], window_strides=(1, 1), padding=((1, 1), (1, 1)),
        dimension_numbers=("NCHW", "OIHW", "NCHW"))
    feat = jnp.maximum(feat + params["conv_b"].reshape(1, C_FEAT, 1, 1), 0.0)
    feat = feat.reshape(N, C_FEAT, HW)
    masks = boxes_to_masks(make_grid_proposals(H, W), H, W)       # (R, HW)
    pooled = jnp.einsum('rp,ncp->nrc', masks, feat)               # (N, R, C)
    cls = pooled @ params["w_cls"] + params["b_cls"]
    det = pooled @ params["w_det"] + params["b_det"]
    obj = (pooled @ params["w_obj"] + params["b_obj"])[..., 0]
    cls_sm = jax.nn.softmax(cls, axis=-1)
    det_sm = jax.nn.softmax(det, axis=1)
    scores = cls_sm * det_sm
    img_scores = jnp.sum(scores, axis=1)
    return scores, img_scores, obj


def init_params():
    key = jax.random.PRNGKey(0)
    k1, k2, k3, k4 = jax.random.split(key, 4)
    return {
        "pixel_mean": jnp.array([[103.5], [116.3], [123.7], [110.0]], jnp.float32),
        "pixel_std": jnp.array([[57.4], [57.1], [58.4], [57.0]], jnp.float32),
        "conv_w": 0.1 * jax.random.normal(k1, (C_FEAT, C_IN, 3, 3), jnp.float32),
        "conv_b": jnp.zeros((1, C_FEAT), jnp.float32),
        "w_cls": 0.05 * jax.random.normal(k2, (C_FEAT, NUM_CLASSES), jnp.float32),
        "b_cls": jnp.zeros((1, NUM_CLASSES), jnp.float32),
        "w_det": 0.05 * jax.random.normal(k3, (C_FEAT, NUM_CLASSES), jnp.float32),
        "b_det": jnp.zeros((1, NUM_CLASSES), jnp.float32),
        "w_obj": 0.05 * jax.random.normal(k4, (C_FEAT, 1), jnp.float32),
        "b_obj": jnp.zeros((1, 1), jnp.float32),
    }


if __name__ == "__main__":
    params = init_params()
    img_key = jax.random.PRNGKey(0)
    images = 255.0 * jax.random.uniform(img_key, (N, C_IN, H, W), jnp.float32)

    out = jax.jit(generalized_rcnn_wsl_forward)(images, params)
    out = jax.block_until_ready(out)

    assert out["scores"].shape == (N, R, NUM_CLASSES)
    assert out["image_scores"].shape == (N, NUM_CLASSES)
    assert out["objectness_logits"].shape == (N, R)
    assert out["pred_boxes"].shape == (N, R, 4)
    assert bool(jnp.all(jnp.isfinite(out["scores"])))

    # numerical check vs the pure-JAX reference of the same simplified forward
    ref_scores, ref_img, ref_obj = jax.jit(reference_forward)(images, params)
    assert bool(jnp.allclose(out["scores"], ref_scores, rtol=1e-2, atol=1e-4))
    assert bool(jnp.allclose(out["image_scores"], ref_img, rtol=1e-2, atol=1e-4))
    assert bool(jnp.allclose(out["objectness_logits"], ref_obj, rtol=1e-2, atol=1e-3))

    print("KERNEL_OK")
</pallas_src>

<mosaic_0001>
module attributes {stable_mosaic.version = 11 : i64} {
  func.func @_fused_rcnn_wsl_kernel(%arg0: i32, %arg1: memref<8x512xf32, #tpu.memory_space<vmem>>, %arg2: memref<72x512xf32, #tpu.memory_space<vmem>>, %arg3: memref<32x72xf32, #tpu.memory_space<vmem>>, %arg4: memref<32x512xf32, #tpu.memory_space<vmem>>, %arg5: memref<16x512xf32, #tpu.memory_space<vmem>>, %arg6: memref<32x384xf32, #tpu.memory_space<vmem>>, %arg7: memref<1x384xf32, #tpu.memory_space<vmem>>, %arg8: memref<34x128xf32, #tpu.memory_space<vmem>>) attributes {dimension_semantics = [#tpu.dimension_semantics<arbitrary>], iteration_bounds = array<i64: 1>, scalar_prefetch = 0 : i64, scratch_operands = 0 : i64, tpu.core_type = #tpu.core_type<tc>, window_params = [{pipeline_mode = #tpu.pipeline_mode<synchronous>, transform_indices = @transform_0, window_bounds = array<i64: 8, 512>}, {pipeline_mode = #tpu.pipeline_mode<synchronous>, transform_indices = @transform_1, window_bounds = array<i64: 72, 512>}, {pipeline_mode = #tpu.pipeline_mode<synchronous>, transform_indices = @transform_2, window_bounds = array<i64: 32, 72>}, {pipeline_mode = #tpu.pipeline_mode<synchronous>, transform_indices = @transform_3, window_bounds = array<i64: 32, 512>}, {pipeline_mode = #tpu.pipeline_mode<synchronous>, transform_indices = @transform_4, window_bounds = array<i64: 16, 512>}, {pipeline_mode = #tpu.pipeline_mode<synchronous>, transform_indices = @transform_5, window_bounds = array<i64: 32, 384>}, {pipeline_mode = #tpu.pipeline_mode<synchronous>, transform_indices = @transform_6, window_bounds = array<i64: 1, 384>}, {pipeline_mode = #tpu.pipeline_mode<synchronous>, transform_indices = @transform_7, window_bounds = array<i64: 34, 128>}]} {
    %c0 = arith.constant 0 : index
    %c0_0 = arith.constant 0 : index
    %0 = vector.load %arg1[%c0, %c0_0] : memref<8x512xf32, #tpu.memory_space<vmem>>, vector<8x512xf32>
    %c17_i32 = arith.constant 17 : i32
    %1 = tpu.dynamic_rotate %0 by %c17_i32 dim 1 : vector<8x512xf32>, i32 -> vector<8x512xf32>
    %c16_i32 = arith.constant 16 : i32
    %2 = tpu.dynamic_rotate %0 by %c16_i32 dim 1 : vector<8x512xf32>, i32 -> vector<8x512xf32>
    %c15_i32 = arith.constant 15 : i32
    %3 = tpu.dynamic_rotate %0 by %c15_i32 dim 1 : vector<8x512xf32>, i32 -> vector<8x512xf32>
    %c1_i32 = arith.constant 1 : i32
    %4 = tpu.dynamic_rotate %0 by %c1_i32 dim 1 : vector<8x512xf32>, i32 -> vector<8x512xf32>
    %c511_i32 = arith.constant 511 : i32
    %5 = tpu.dynamic_rotate %0 by %c511_i32 dim 1 : vector<8x512xf32>, i32 -> vector<8x512xf32>
    %c497_i32 = arith.constant 497 : i32
    %6 = tpu.dynamic_rotate %0 by %c497_i32 dim 1 : vector<8x512xf32>, i32 -> vector<8x512xf32>
    %c496_i32 = arith.constant 496 : i32
    %7 = tpu.dynamic_rotate %0 by %c496_i32 dim 1 : vector<8x512xf32>, i32 -> vector<8x512xf32>
    %c495_i32 = arith.constant 495 : i32
    %8 = tpu.dynamic_rotate %0 by %c495_i32 dim 1 : vector<8x512xf32>, i32 -> vector<8x512xf32>
    %9 = tpu.concatenate %1, %2, %3, %4, %0, %5, %6, %7, %8 in 0 : vector<8x512xf32>, vector<8x512xf32>, vector<8x512xf32>, vector<8x512xf32>, vector<8x512xf32>, vector<8x512xf32>, vector<8x512xf32>, vector<8x512xf32>, vector<8x512xf32> -> vector<72x512xf32>
    %c0_1 = arith.constant 0 : index
    %c0_2 = arith.constant 0 : index
    %10 = vector.load %arg2[%c0_1, %c0_2] : memref<72x512xf32, #tpu.memory_space<vmem>>, vector<72x512xf32>
    %11 = arith.mulf %9, %10 : vector<72x512xf32>
    %c0_3 = arith.constant 0 : index
    %c0_4 = arith.constant 0 : index
    %12 = vector.load %arg3[%c0_3, %c0_4] : memref<32x72xf32, #tpu.memory_space<vmem>>, vector<32x72xf32>
    %cst = arith.constant dense<0.000000e+00> : vector<32x512xf32>
    %13 = tpu.matmul %12, %11, %cst {dimension_numbers = #tpu.dot_dimension_numbers<[1], [0], [0], [1], [0, 0, 1, 1], [], []>} : vector<32x72xf32>, vector<72x512xf32>, vector<32x512xf32> -> vector<32x512xf32>
    %c0_5 = arith.constant 0 : index
    %c0_6 = arith.constant 0 : index
    %14 = vector.load %arg4[%c0_5, %c0_6] : memref<32x512xf32, #tpu.memory_space<vmem>>, vector<32x512xf32>
    %15 = arith.addf %13, %14 : vector<32x512xf32>
    %cst_7 = arith.constant 0.000000e+00 : f32
    %16 = vector.broadcast %cst_7 : f32 to vector<32x512xf32>
    %17 = arith.maximumf %15, %16 : vector<32x512xf32>
    %c0_8 = arith.constant 0 : index
    %c0_9 = arith.constant 0 : index
    %18 = vector.load %arg5[%c0_8, %c0_9] : memref<16x512xf32, #tpu.memory_space<vmem>>, vector<16x512xf32>
    %cst_10 = arith.constant dense<0.000000e+00> : vector<16x32xf32>
    %19 = tpu.matmul %18, %17, %cst_10 {dimension_numbers = #tpu.dot_dimension_numbers<[1], [1], [0], [0], [0, 0, 1, 0], [], []>} : vector<16x512xf32>, vector<32x512xf32>, vector<16x32xf32> -> vector<16x32xf32>
    %c0_11 = arith.constant 0 : index
    %c0_12 = arith.constant 0 : index
    %20 = vector.load %arg6[%c0_11, %c0_12] : memref<32x384xf32, #tpu.memory_space<vmem>>, vector<32x384xf32>
    %c0_13 = arith.constant 0 : index
    %c0_14 = arith.constant 0 : index
    %21 = vector.load %arg7[%c0_13, %c0_14] : memref<1x384xf32, #tpu.memory_space<vmem>>, vector<1x384xf32>
    %22 = vector.extract_strided_slice %19 {offsets = [0, 0], sizes = [8, 32], strides = [1, 1]} : vector<16x32xf32> to vector<8x32xf32>
    %cst_15 = arith.constant dense<0.000000e+00> : vector<8x384xf32>
    %23 = tpu.matmul %22, %20, %cst_15 {dimension_numbers = #tpu.dot_dimension_numbers<[1], [0], [0], [1], [0, 0, 1, 1], [], []>} : vector<8x32xf32>, vector<32x384xf32>, vector<8x384xf32> -> vector<8x384xf32>
    %24 = vector.broadcast %21 : vector<1x384xf32> to vector<8x384xf32>
    %25 = arith.addf %23, %24 : vector<8x384xf32>
    %26 = vector.extract_strided_slice %25 {offsets = [0, 0], sizes = [8, 128], strides = [1, 1]} : vector<8x384xf32> to vector<8x128xf32>
    %27 = vector.extract_strided_slice %25 {offsets = [0, 128], sizes = [8, 128], strides = [1, 1]} : vector<8x384xf32> to vector<8x128xf32>
    %28 = vector.extract_strided_slice %25 {offsets = [0, 256], sizes = [8, 128], strides = [1, 1]} : vector<8x384xf32> to vector<8x128xf32>
    %cst_16 = arith.constant dense<0xFF800000> : vector<8xf32>
    %29 = vector.multi_reduction <maximumf>, %26, %cst_16 [1] : vector<8x128xf32> to vector<8xf32>
    %30 = vector.shape_cast %29 : vector<8xf32> to vector<8x1xf32>
    %31 = vector.broadcast %30 : vector<8x1xf32> to vector<8x128xf32>
    %32 = arith.subf %26, %31 : vector<8x128xf32>
    %33 = math.exp %32 : vector<8x128xf32>
    %cst_17 = arith.constant dense<0.000000e+00> : vector<8xf32>
    %34 = vector.multi_reduction <add>, %33, %cst_17 [1] : vector<8x128xf32> to vector<8xf32>
    %35 = vector.shape_cast %34 : vector<8xf32> to vector<8x1xf32>
    %36 = vector.broadcast %35 : vector<8x1xf32> to vector<8x128xf32>
    %37 = arith.divf %33, %36 : vector<8x128xf32>
    %cst_18 = arith.constant dense<0xFF800000> : vector<128xf32>
    %38 = vector.multi_reduction <maximumf>, %27, %cst_18 [0] : vector<8x128xf32> to vector<128xf32>
    %39 = vector.shape_cast %38 : vector<128xf32> to vector<1x128xf32>
    %40 = vector.broadcast %39 : vector<1x128xf32> to vector<8x128xf32>
    %41 = arith.subf %27, %40 : vector<8x128xf32>
    %42 = math.exp %41 : vector<8x128xf32>
    %cst_19 = arith.constant dense<0.000000e+00> : vector<128xf32>
    %43 = vector.multi_reduction <add>, %42, %cst_19 [0] : vector<8x128xf32> to vector<128xf32>
    %44 = vector.shape_cast %43 : vector<128xf32> to vector<1x128xf32>
    %45 = vector.broadcast %44 : vector<1x128xf32> to vector<8x128xf32>
    %46 = arith.divf %42, %45 : vector<8x128xf32>
    %47 = arith.mulf %37, %46 : vector<8x128xf32>
    %cst_20 = arith.constant dense<0.000000e+00> : vector<128xf32>
    %48 = vector.multi_reduction <add>, %47, %cst_20 [0] : vector<8x128xf32> to vector<128xf32>
    %49 = vector.shape_cast %48 : vector<128xf32> to vector<1x128xf32>
    %c0_21 = arith.constant 0 : index
    %c0_22 = arith.constant 0 : index
    %50 = vector.load %arg8[%c0_21, %c0_22] : memref<34x128xf32, #tpu.memory_space<vmem>>, vector<8x128xf32>
    tpu.vector_store %arg8[%c0_21, %c0_22], %47 {strides = array<i32>} : memref<34x128xf32, #tpu.memory_space<vmem>>, vector<8x128xf32>,
    %c16 = arith.constant 16 : index
    %c0_23 = arith.constant 0 : index
    %51 = vector.load %arg8[%c16, %c0_23] : memref<34x128xf32, #tpu.memory_space<vmem>>, vector<8x128xf32>
    tpu.vector_store %arg8[%c16, %c0_23], %28 {strides = array<i32>} : memref<34x128xf32, #tpu.memory_space<vmem>>, vector<8x128xf32>,
    %c32 = arith.constant 32 : index
    %c0_24 = arith.constant 0 : index
    %52 = vector.load %arg8[%c32, %c0_24] : memref<34x128xf32, #tpu.memory_space<vmem>>, vector<1x128xf32>
    tpu.vector_store %arg8[%c32, %c0_24], %49 {strides = array<i32>} : memref<34x128xf32, #tpu.memory_space<vmem>>, vector<1x128xf32>,
    %53 = vector.extract_strided_slice %19 {offsets = [8, 0], sizes = [8, 32], strides = [1, 1]} : vector<16x32xf32> to vector<8x32xf32>
    %cst_25 = arith.constant dense<0.000000e+00> : vector<8x384xf32>
    %54 = tpu.matmul %53, %20, %cst_25 {dimension_numbers = #tpu.dot_dimension_numbers<[1], [0], [0], [1], [0, 0, 1, 1], [], []>} : vector<8x32xf32>, vector<32x384xf32>, vector<8x384xf32> -> vector<8x384xf32>
    %55 = vector.broadcast %21 : vector<1x384xf32> to vector<8x384xf32>
    %56 = arith.addf %54, %55 : vector<8x384xf32>
    %57 = vector.extract_strided_slice %56 {offsets = [0, 0], sizes = [8, 128], strides = [1, 1]} : vector<8x384xf32> to vector<8x128xf32>
    %58 = vector.extract_strided_slice %56 {offsets = [0, 128], sizes = [8, 128], strides = [1, 1]} : vector<8x384xf32> to vector<8x128xf32>
    %59 = vector.extract_strided_slice %56 {offsets = [0, 256], sizes = [8, 128], strides = [1, 1]} : vector<8x384xf32> to vector<8x128xf32>
    %cst_26 = arith.constant dense<0xFF800000> : vector<8xf32>
    %60 = vector.multi_reduction <maximumf>, %57, %cst_26 [1] : vector<8x128xf32> to vector<8xf32>
    %61 = vector.shape_cast %60 : vector<8xf32> to vector<8x1xf32>
    %62 = vector.broadcast %61 : vector<8x1xf32> to vector<8x128xf32>
    %63 = arith.subf %57, %62 : vector<8x128xf32>
    %64 = math.exp %63 : vector<8x128xf32>
    %cst_27 = arith.constant dense<0.000000e+00> : vector<8xf32>
    %65 = vector.multi_reduction <add>, %64, %cst_27 [1] : vector<8x128xf32> to vector<8xf32>
    %66 = vector.shape_cast %65 : vector<8xf32> to vector<8x1xf32>
    %67 = vector.broadcast %66 : vector<8x1xf32> to vector<8x128xf32>
    %68 = arith.divf %64, %67 : vector<8x128xf32>
    %cst_28 = arith.constant dense<0xFF800000> : vector<128xf32>
    %69 = vector.multi_reduction <maximumf>, %58, %cst_28 [0] : vector<8x128xf32> to vector<128xf32>
    %70 = vector.shape_cast %69 : vector<128xf32> to vector<1x128xf32>
    %71 = vector.broadcast %70 : vector<1x128xf32> to vector<8x128xf32>
    %72 = arith.subf %58, %71 : vector<8x128xf32>
    %73 = math.exp %72 : vector<8x128xf32>
    %cst_29 = arith.constant dense<0.000000e+00> : vector<128xf32>
    %74 = vector.multi_reduction <add>, %73, %cst_29 [0] : vector<8x128xf32> to vector<128xf32>
    %75 = vector.shape_cast %74 : vector<128xf32> to vector<1x128xf32>
    %76 = vector.broadcast %75 : vector<1x128xf32> to vector<8x128xf32>
    %77 = arith.divf %73, %76 : vector<8x128xf32>
    %78 = arith.mulf %68, %77 : vector<8x128xf32>
    %cst_30 = arith.constant dense<0.000000e+00> : vector<128xf32>
    %79 = vector.multi_reduction <add>, %78, %cst_30 [0] : vector<8x128xf32> to vector<128xf32>
    %80 = vector.shape_cast %79 : vector<128xf32> to vector<1x128xf32>
    %c8 = arith.constant 8 : index
    %c0_31 = arith.constant 0 : index
    %81 = vector.load %arg8[%c8, %c0_31] : memref<34x128xf32, #tpu.memory_space<vmem>>, vector<8x128xf32>
    tpu.vector_store %arg8[%c8, %c0_31], %78 {strides = array<i32>} : memref<34x128xf32, #tpu.memory_space<vmem>>, vector<8x128xf32>,
    %c24 = arith.constant 24 : index
    %c0_32 = arith.constant 0 : index
    %82 = vector.load %arg8[%c24, %c0_32] : memref<34x128xf32, #tpu.memory_space<vmem>>, vector<8x128xf32>
    tpu.vector_store %arg8[%c24, %c0_32], %59 {strides = array<i32>} : memref<34x128xf32, #tpu.memory_space<vmem>>, vector<8x128xf32>,
    %c33 = arith.constant 33 : index
    %c0_33 = arith.constant 0 : index
    %83 = vector.load %arg8[%c33, %c0_33] : memref<34x128xf32, #tpu.memory_space<vmem>>, vector<1x128xf32>
    tpu.vector_store %arg8[%c33, %c0_33], %80 {strides = array<i32>} : memref<34x128xf32, #tpu.memory_space<vmem>>, vector<1x128xf32>,
    return
  }
  func.func @transform_0(%arg0: i32) -> (i32, i32) {
    %c0_i32 = arith.constant 0 : i32
    %c0_i32_0 = arith.constant 0 : i32
    %c0_i32_1 = arith.constant 0 : i32
    return %c0_i32, %c0_i32_0 : i32, i32
  }
  func.func @transform_1(%arg0: i32) -> (i32, i32) {
    %c0_i32 = arith.constant 0 : i32
    %c0_i32_0 = arith.constant 0 : i32
    %c0_i32_1 = arith.constant 0 : i32
    return %c0_i32, %c0_i32_0 : i32, i32
  }
  func.func @transform_2(%arg0: i32) -> (i32, i32) {
    %c0_i32 = arith.constant 0 : i32
    %c0_i32_0 = arith.constant 0 : i32
    %c0_i32_1 = arith.constant 0 : i32
    return %c0_i32, %c0_i32_0 : i32, i32
  }
  func.func @transform_3(%arg0: i32) -> (i32, i32) {
    %c0_i32 = arith.constant 0 : i32
    %c0_i32_0 = arith.constant 0 : i32
    %c0_i32_1 = arith.constant 0 : i32
    return %c0_i32, %c0_i32_0 : i32, i32
  }
  func.func @transform_4(%arg0: i32) -> (i32, i32) {
    %c0_i32 = arith.constant 0 : i32
    %c0_i32_0 = arith.constant 0 : i32
    %c0_i32_1 = arith.constant 0 : i32
    return %c0_i32, %c0_i32_0 : i32, i32
  }
  func.func @transform_5(%arg0: i32) -> (i32, i32) {
    %c0_i32 = arith.constant 0 : i32
    %c0_i32_0 = arith.constant 0 : i32
    %c0_i32_1 = arith.constant 0 : i32
    return %c0_i32, %c0_i32_0 : i32, i32
  }
  func.func @transform_6(%arg0: i32) -> (i32, i32) {
    %c0_i32 = arith.constant 0 : i32
    %c0_i32_0 = arith.constant 0 : i32
    %c0_i32_1 = arith.constant 0 : i32
    return %c0_i32, %c0_i32_0 : i32, i32
  }
  func.func @transform_7(%arg0: i32) -> (i32, i32) {
    %c0_i32 = arith.constant 0 : i32
    %c0_i32_0 = arith.constant 0 : i32
    %c0_i32_1 = arith.constant 0 : i32
    return %c0_i32, %c0_i32_0 : i32, i32
  }
}

</mosaic_0001>

<llo_original>
// kernel: squeeze.1
$region0: #{squeeze.1}
  %s0 = inlined_call_operand.vmem [shape: f32[16], index: 0, kind: input, shape index: {}]
  %s1 = inlined_call_operand.hbm [shape: f32[2,8], index: 1, kind: output, shape index: {}]
  $region1: #{squeeze.1} parent=0
    #allocation0 [shape = 'u8[1024]{0}', space=vmem, size = 0x400, scoped, tag = 'operand span for operand 1']
    #allocation1 [shape = 's32[1]{0}', space=sflag, size = 0x4, scoped, tag = 'scoped memory for squeeze.1']
    #allocation2 [shape = 'u8[4096]{0}', space=vmem, size = 0x1000, scoped, tag = 'scoped mem for output reshape']
    #allocation3 [shape = 'u8[4096]{0}', space=vmem, size = 0x1000, scoped, tag = 'scoped mem for input reshape']
    %2 = vsyncpa [#allocation1], 0
    %s4 = sshll.u32 1, 1
    %s5 = ssub.s32 %s4, 1
    %v6 = vld [vmem:[%s0] sm:%s5]
    %7 = vst [vmem:[#allocation3] sm:%s5] %v6
    %v8 = vld [vmem:[#allocation3] sm:$0x1]
    %vm9 = vcmask 64512
    %10 = vst.msk [vmem:[#allocation2] sm:$0x1] %vm9, %v8
    %v11 = vld [vmem:[#allocation3] sm:$0x1]
    %12 = vrot.lane.b32.xlu0 %v11, 120
    %v13 = vpop.permute.xlu0 %12
    %vm14 = vcmask 64512
    %s15 = scalar_lea.vmem [#allocation2], 1
    %16 = vst.msk [vmem:[%s15] sm:$0x1] %vm14, %v13
    %s18 = sshll.u32 1, 2
    %s19 = ssub.s32 %s18, 1
    %v21 = vld [vmem:[#allocation2] sm:%s19]
    %s22 = sshll.u32 1, 2
    %s23 = ssub.s32 %s22, 1
    %24 = vst [vmem:[#allocation0] sm:%s23] %v21
    %s26 = ssub.s32 32, 32
    %27 = vsyncadd [#allocation1], %s26
    %s29 = sshll.u32 [#allocation0], 4
    %s30 = int_to_ptr.vmem [resolvable:$true] %s29
    %32 = dma.vmem_to_hbm [thread:$0]  %s30, 32, %s1, [#allocation1]
    %33 = dma.done [#allocation1], 32
    %34 = vsyncpa [#allocation1], 1

// kernel: generalized_rcnn_wsl_forward.1
$region0: #{generalized_rcnn_wsl_forward.1}
  #allocation0 [shape = 'u32[]', space=smem, size = 0x4, offset = 0x4, fixed_abs, tag = 'smem constant byte address 0x4 - core index']
  #allocation1 [shape = 'u32[144,128]{1,0:T(1,128)}', space=vmem, size = 0x12000, scoped, tag = 'internal scratch']
  %s0 = inlined_call_operand.vmem [shape: f32[8,512], index: 0, kind: input, shape index: {}]
  %s1 = inlined_call_operand.vmem [shape: f32[72,512], index: 1, kind: input, shape index: {}]
  %s2 = inlined_call_operand.vmem [shape: f32[32,72], index: 2, kind: input, shape index: {}]
  %s3 = inlined_call_operand.vmem [shape: f32[32,512], index: 3, kind: input, shape index: {}]
  %s4 = inlined_call_operand.vmem [shape: f32[16,512], index: 4, kind: input, shape index: {}]
  %s5 = inlined_call_operand.vmem [shape: f32[32,384], index: 5, kind: input, shape index: {}]
  %s6 = inlined_call_operand.vmem [shape: f32[1,384], index: 6, kind: input, shape index: {}]
  %s7 = inlined_call_operand.vmem [shape: f32[34,128], index: 7, kind: output, shape index: {}]
  %s8 = sld [smem:[#allocation0]]
  $region38: #{generalized_rcnn_wsl_forward.1} parent=0
    _
  %s10 = ssub.s32 1, %s8
  %s11 = scalar_select 0, %s10, %s8
  // Predicated region
  $region2: #{generalized_rcnn_wsl_forward.1} parent=0 // pred_check
    _
  $region3: #{generalized_rcnn_wsl_forward.1} parent=0 // pred_check_branch
    %13 = sbr.rel (0) target = $region5
  $region4: #{generalized_rcnn_wsl_forward.1} parent=0 // pred_region
    _
  $region5: #{generalized_rcnn_wsl_forward.1} parent=0 // pred_fallthru
    _
  // Predicated region
  $region6: #{generalized_rcnn_wsl_forward.1} parent=0 // pred_check
    _
  $region7: #{generalized_rcnn_wsl_forward.1} parent=0 // pred_check_branch
    %15 = sbr.rel (0) target = $region9
  $region8: #{generalized_rcnn_wsl_forward.1} parent=0 // pred_region
    _
  $region9: #{generalized_rcnn_wsl_forward.1} parent=0 // pred_fallthru
    _
  // Predicated region
  $region10: #{generalized_rcnn_wsl_forward.1} parent=0 // pred_check
    _
  $region11: #{generalized_rcnn_wsl_forward.1} parent=0 // pred_check_branch
    %17 = sbr.rel (0) target = $region13
  $region12: #{generalized_rcnn_wsl_forward.1} parent=0 // pred_region
    _
  $region13: #{generalized_rcnn_wsl_forward.1} parent=0 // pred_fallthru
    _
  // Predicated region
  $region14: #{generalized_rcnn_wsl_forward.1} parent=0 // pred_check
    _
  $region15: #{generalized_rcnn_wsl_forward.1} parent=0 // pred_check_branch
    %19 = sbr.rel (0) target = $region17
  $region16: #{generalized_rcnn_wsl_forward.1} parent=0 // pred_region
    _
  $region17: #{generalized_rcnn_wsl_forward.1} parent=0 // pred_fallthru
    _
  // Predicated region
  $region18: #{generalized_rcnn_wsl_forward.1} parent=0 // pred_check
    _
  $region19: #{generalized_rcnn_wsl_forward.1} parent=0 // pred_check_branch
    %21 = sbr.rel (0) target = $region21
  $region20: #{generalized_rcnn_wsl_forward.1} parent=0 // pred_region
    _
  $region21: #{generalized_rcnn_wsl_forward.1} parent=0 // pred_fallthru
    _
  // Predicated region
  $region22: #{generalized_rcnn_wsl_forward.1} parent=0 // pred_check
    _
  $region23: #{generalized_rcnn_wsl_forward.1} parent=0 // pred_check_branch
    %23 = sbr.rel (0) target = $region25
  $region24: #{generalized_rcnn_wsl_forward.1} parent=0 // pred_region
    _
  $region25: #{generalized_rcnn_wsl_forward.1} parent=0 // pred_fallthru
    _
  // Predicated region
  $region26: #{generalized_rcnn_wsl_forward.1} parent=0 // pred_check
    _
  $region27: #{generalized_rcnn_wsl_forward.1} parent=0 // pred_check_branch
    %25 = sbr.rel (0) target = $region29
  $region28: #{generalized_rcnn_wsl_forward.1} parent=0 // pred_region
    _
  $region29: #{generalized_rcnn_wsl_forward.1} parent=0 // pred_fallthru
    _
  %v26 = vld [vmem:[%s0] sm:$0xff]
  %v27 = vld [vmem:[%s0 + $0x8] sm:$0xff]
  %v28 = vld [vmem:[%s0 + $0x10] sm:$0xff]
  %v29 = vld [vmem:[%s0 + $0x18] sm:$0xff]
  %30 = vrot.lane.b32.xlu0 %v26, 17
  %v31 = vpop.permute.xlu0 %30
  %32 = vrot.lane.b32.xlu0 %v27, 17
  %v33 = vpop.permute.xlu0 %32
  %34 = vrot.lane.b32.xlu0 %v28, 17
  %v35 = vpop.permute.xlu0 %34
  %36 = vrot.lane.b32.xlu0 %v29, 17
  %v37 = vpop.permute.xlu0 %36
  %v38 = vlaneseq
  %v39 = vand.u32 %v38, 127
  %vm40 = vcmp.lt.s32.totalorder %v39, 17
  %v41 = vsel %vm40, %v35, %v37
  %v42 = vsel %vm40, %v33, %v35
  %v43 = vsel %vm40, %v31, %v33
  %v44 = vsel %vm40, %v37, %v31
  %45 = vrot.lane.b32.xlu0 %v26, 16
  %v46 = vpop.permute.xlu0 %45
  %47 = vrot.lane.b32.xlu0 %v27, 16
  %v48 = vpop.permute.xlu0 %47
  %49 = vrot.lane.b32.xlu0 %v28, 16
  %v50 = vpop.permute.xlu0 %49
  %51 = vrot.lane.b32.xlu0 %v29, 16
  %v52 = vpop.permute.xlu0 %51
  %vm53 = vcmp.lt.s32.totalorder %v39, 16
  %v54 = vsel %vm53, %v50, %v52
  %v55 = vsel %vm53, %v48, %v50
  %v56 = vsel %vm53, %v46, %v48
  %v57 = vsel %vm53, %v52, %v46
  %58 = vrot.lane.b32.xlu0 %v26, 15
  %v59 = vpop.permute.xlu0 %58
  %60 = vrot.lane.b32.xlu0 %v27, 15
  %v61 = vpop.permute.xlu0 %60
  %62 = vrot.lane.b32.xlu0 %v28, 15
  %v63 = vpop.permute.xlu0 %62
  %64 = vrot.lane.b32.xlu0 %v29, 15
  %v65 = vpop.permute.xlu0 %64
  %vm66 = vcmp.lt.s32.totalorder %v39, 15
  %v67 = vsel %vm66, %v63, %v65
  %v68 = vsel %vm66, %v61, %v63
  %v69 = vsel %vm66, %v59, %v61
  %v70 = vsel %vm66, %v65, %v59
  %71 = vrot.lane.b32.xlu0 %v26, 1
  %v72 = vpop.permute.xlu0 %71
  %73 = vrot.lane.b32.xlu0 %v27, 1
  %v74 = vpop.permute.xlu0 %73
  %75 = vrot.lane.b32.xlu0 %v28, 1
  %v76 = vpop.permute.xlu0 %75
  %77 = vrot.lane.b32.xlu0 %v29, 1
  %v78 = vpop.permute.xlu0 %77
  %vm79 = vcmp.lt.s32.totalorder %v39, 1
  %v80 = vsel %vm79, %v76, %v78
  %v81 = vsel %vm79, %v74, %v76
  %v82 = vsel %vm79, %v72, %v74
  %v83 = vsel %vm79, %v78, %v72
  %84 = vrot.lane.b32.xlu0 %v26, 127
  %v85 = vpop.permute.xlu0 %84
  %86 = vrot.lane.b32.xlu0 %v27, 127
  %v87 = vpop.permute.xlu0 %86
  %88 = vrot.lane.b32.xlu0 %v28, 127
  %v89 = vpop.permute.xlu0 %88
  %90 = vrot.lane.b32.xlu0 %v29, 127
  %v91 = vpop.permute.xlu0 %90
  %vm92 = vcmp.lt.s32.totalorder %v39, 127
  %v93 = vsel %vm92, %v89, %v91
  %v94 = vsel %vm92, %v87, %v89
  %v95 = vsel %vm92, %v85, %v87
  %v96 = vsel %vm92, %v91, %v85
  %97 = vrot.lane.b32.xlu0 %v26, 113
  %v98 = vpop.permute.xlu0 %97
  %99 = vrot.lane.b32.xlu0 %v27, 113
  %v100 = vpop.permute.xlu0 %99
  %101 = vrot.lane.b32.xlu0 %v28, 113
  %v102 = vpop.permute.xlu0 %101
  %103 = vrot.lane.b32.xlu0 %v29, 113
  %v104 = vpop.permute.xlu0 %103
  %vm105 = vcmp.lt.s32.totalorder %v39, 113
  %v106 = vsel %vm105, %v102, %v104
  %v107 = vsel %vm105, %v100, %v102
  %v108 = vsel %vm105, %v98, %v100
  %v109 = vsel %vm105, %v104, %v98
  %110 = vrot.lane.b32.xlu0 %v26, 112
  %v111 = vpop.permute.xlu0 %110
  %112 = vrot.lane.b32.xlu0 %v27, 112
  %v113 = vpop.permute.xlu0 %112
  %114 = vrot.lane.b32.xlu0 %v28, 112
  %v115 = vpop.permute.xlu0 %114
  %116 = vrot.lane.b32.xlu0 %v29, 112
  %v117 = vpop.permute.xlu0 %116
  %vm118 = vcmp.lt.s32.totalorder %v39, 112
  %v119 = vsel %vm118, %v115, %v117
  %v120 = vsel %vm118, %v113, %v115
  %v121 = vsel %vm118, %v111, %v113
  %v122 = vsel %vm118, %v117, %v111
  %123 = vrot.lane.b32.xlu0 %v26, 111
  %v124 = vpop.permute.xlu0 %123
  %125 = vrot.lane.b32.xlu0 %v27, 111
  %v126 = vpop.permute.xlu0 %125
  %127 = vrot.lane.b32.xlu0 %v28, 111
  %v128 = vpop.permute.xlu0 %127
  %129 = vrot.lane.b32.xlu0 %v29, 111
  %v130 = vpop.permute.xlu0 %129
  %vm131 = vcmp.lt.s32.totalorder %v39, 111
  %v132 = vsel %vm131, %v128, %v130
  %v133 = vsel %vm131, %v126, %v128
  %v134 = vsel %vm131, %v124, %v126
  %v135 = vsel %vm131, %v130, %v124
  %v136 = vld [vmem:[%s1] sm:$0xff]
  %v137 = vld [vmem:[%s1 + $0x8] sm:$0xff]
  %v138 = vld [vmem:[%s1 + $0x10] sm:$0xff]
  %v139 = vld [vmem:[%s1 + $0x18] sm:$0xff]
  %v140 = vld [vmem:[%s1 + $0x20] sm:$0xff]
  %v141 = vld [vmem:[%s1 + $0x28] sm:$0xff]
  %v142 = vld [vmem:[%s1 + $0x30] sm:$0xff]
  %v143 = vld [vmem:[%s1 + $0x38] sm:$0xff]
  %v144 = vld [vmem:[%s1 + $0x40] sm:$0xff]
  %v145 = vld [vmem:[%s1 + $0x48] sm:$0xff]
  %v146 = vld [vmem:[%s1 + $0x50] sm:$0xff]
  %v147 = vld [vmem:[%s1 + $0x58] sm:$0xff]
  %v148 = vld [vmem:[%s1 + $0x60] sm:$0xff]
  %v149 = vld [vmem:[%s1 + $0x68] sm:$0xff]
  %v150 = vld [vmem:[%s1 + $0x70] sm:$0xff]
  %v151 = vld [vmem:[%s1 + $0x78] sm:$0xff]
  %v152 = vld [vmem:[%s1 + $0x80] sm:$0xff]
  %v153 = vld [vmem:[%s1 + $0x88] sm:$0xff]
  %v154 = vld [vmem:[%s1 + $0x90] sm:$0xff]
  %v155 = vld [vmem:[%s1 + $0x98] sm:$0xff]
  %v156 = vld [vmem:[%s1 + $0xa0] sm:$0xff]
  %v157 = vld [vmem:[%s1 + $0xa8] sm:$0xff]
  %v158 = vld [vmem:[%s1 + $0xb0] sm:$0xff]
  %v159 = vld [vmem:[%s1 + $0xb8] sm:$0xff]
  %v160 = vld [vmem:[%s1 + $0xc0] sm:$0xff]
  %v161 = vld [vmem:[%s1 + $0xc8] sm:$0xff]
  %v162 = vld [vmem:[%s1 + $0xd0] sm:$0xff]
  %v163 = vld [vmem:[%s1 + $0xd8] sm:$0xff]
  %v164 = vld [vmem:[%s1 + $0xe0] sm:$0xff]
  %v165 = vld [vmem:[%s1 + $0xe8] sm:$0xff]
  %v166 = vld [vmem:[%s1 + $0xf0] sm:$0xff]
  %v167 = vld [vmem:[%s1 + $0xf8] sm:$0xff]
  %v168 = vld [vmem:[%s1 + $0x100] sm:$0xff]
  %v169 = vld [vmem:[%s1 + $0x108] sm:$0xff]
  %v170 = vld [vmem:[%s1 + $0x110] sm:$0xff]
  %v171 = vld [vmem:[%s1 + $0x118] sm:$0xff]
  %v172 = vmul.f32 %v44, %v136
  %v173 = vmul.f32 %v43, %v137
  %v174 = vmul.f32 %v42, %v138
  %v175 = vmul.f32 %v41, %v139
  %v176 = vmul.f32 %v57, %v140
  %v177 = vmul.f32 %v56, %v141
  %v178 = vmul.f32 %v55, %v142
  %v179 = vmul.f32 %v54, %v143
  %v180 = vmul.f32 %v70, %v144
  %v181 = vmul.f32 %v69, %v145
  %v182 = vmul.f32 %v68, %v146
  %v183 = vmul.f32 %v67, %v147
  %v184 = vmul.f32 %v83, %v148
  %v185 = vmul.f32 %v82, %v149
  %v186 = vmul.f32 %v81, %v150
  %v187 = vmul.f32 %v80, %v151
  %v188 = vmul.f32 %v26, %v152
  %v189 = vmul.f32 %v27, %v153
  %v190 = vmul.f32 %v28, %v154
  %v191 = vmul.f32 %v29, %v155
  %v192 = vmul.f32 %v95, %v156
  %v193 = vmul.f32 %v94, %v157
  %v194 = vmul.f32 %v93, %v158
  %v195 = vmul.f32 %v96, %v159
  %v196 = vmul.f32 %v108, %v160
  %v197 = vmul.f32 %v107, %v161
  %v198 = vmul.f32 %v106, %v162
  %v199 = vmul.f32 %v109, %v163
  %v200 = vmul.f32 %v121, %v164
  %v201 = vmul.f32 %v120, %v165
  %v202 = vmul.f32 %v119, %v166
  %v203 = vmul.f32 %v122, %v167
  %v204 = vmul.f32 %v134, %v168
  %v205 = vmul.f32 %v133, %v169
  %v206 = vmul.f32 %v132, %v170
  %v207 = vmul.f32 %v135, %v171
  %v208 = vld [vmem:[%s2] sm:$0xff]
  %v209 = vld [vmem:[%s2 + $0x8] sm:$0xff]
  %v210 = vld [vmem:[%s2 + $0x10] sm:$0xff]
  %v211 = vld [vmem:[%s2 + $0x18] sm:$0xff]
  %v212 = vld [vmem:[%s3] sm:$0xff]
  %v213 = vld [vmem:[%s3 + $0x8] sm:$0xff]
  %v214 = vld [vmem:[%s3 + $0x10] sm:$0xff]
  %v215 = vld [vmem:[%s3 + $0x18] sm:$0xff]
  %v216 = vld [vmem:[%s3 + $0x20] sm:$0xff]
  %v217 = vld [vmem:[%s3 + $0x28] sm:$0xff]
  %v218 = vld [vmem:[%s3 + $0x30] sm:$0xff]
  %v219 = vld [vmem:[%s3 + $0x38] sm:$0xff]
  %v220 = vld [vmem:[%s3 + $0x40] sm:$0xff]
  %v221 = vld [vmem:[%s3 + $0x48] sm:$0xff]
  %v222 = vld [vmem:[%s3 + $0x50] sm:$0xff]
  %v223 = vld [vmem:[%s3 + $0x58] sm:$0xff]
  %v224 = vld [vmem:[%s3 + $0x60] sm:$0xff]
  %v225 = vld [vmem:[%s3 + $0x68] sm:$0xff]
  %v226 = vld [vmem:[%s3 + $0x70] sm:$0xff]
  %v227 = vld [vmem:[%s3 + $0x78] sm:$0xff]
  %vm228 = vcmask 588800
  %v230 = vsel %vm228, %v208, 0
  %v233 = vsel %vm228, %v209, 0
  %v236 = vsel %vm228, %v210, 0
  %v239 = vsel %vm228, %v211, 0
  %241 = vmatprep.subr.mxu0 0.0
  %242 = vmatpush1.msra.mxu0 0.0
  %243 = vmatprep.subr.mxu0 0.0
  %244 = vmatpush1.msra.mxu0 0.0
  %245 = vmatprep.subr.mxu0 0.0
  %246 = vmatpush1.msra.mxu0 0.0
  %247 = vmatprep.subr.mxu0 0.0
  %248 = vmatpush1.msra.mxu0 0.0
  %249 = vmatprep.subr.mxu0 0.0
  %250 = vmatpush1.msra.mxu0 0.0
  %251 = vmatprep.subr.mxu0 0.0
  %252 = vmatpush1.msra.mxu0 0.0
  %253 = vmatprep.subr.mxu0 0.0
  %254 = vmatpush1.msra.mxu0 0.0
  %255 = vmatprep.subr.mxu0 %v205
  %256 = vmatpush1.msra.mxu0 %v204
  %257 = vmatprep.subr.mxu0 %v201
  %258 = vmatpush1.msra.mxu0 %v200
  %259 = vmatprep.subr.mxu0 %v197
  %260 = vmatpush1.msra.mxu0 %v196
  %261 = vmatprep.subr.mxu0 %v193
  %262 = vmatpush1.msra.mxu0 %v192
  %263 = vmatprep.subr.mxu0 %v189
  %264 = vmatpush1.msra.mxu0 %v188
  %265 = vmatprep.subr.mxu0 %v185
  %266 = vmatpush1.msra.mxu0 %v184
  %267 = vmatprep.subr.mxu0 %v181
  %268 = vmatpush1.msra.mxu0 %v180
  %269 = vmatprep.subr.mxu0 %v177
  %270 = vmatpush1.msra.mxu0 %v176
  %271 = vmatprep.subr.mxu0 %v173
  %272 = vmatpush1.msra.mxu0 %v172
  %273 = vmatprep.subr.mxu0 0.0
  %274 = vmatpush2.msra.mxu0 0.0
  %275 = vmatprep.subr.mxu0 0.0
  %276 = vmatpush2.msra.mxu0 0.0
  %277 = vmatprep.subr.mxu0 0.0
  %278 = vmatpush2.msra.mxu0 0.0
  %279 = vmatprep.subr.mxu0 0.0
  %280 = vmatpush2.msra.mxu0 0.0
  %281 = vmatprep.subr.mxu0 0.0
  %282 = vmatpush2.msra.mxu0 0.0
  %283 = vmatprep.subr.mxu0 0.0
  %284 = vmatpush2.msra.mxu0 0.0
  %285 = vmatprep.subr.mxu0 0.0
  %286 = vmatpush2.msra.mxu0 0.0
  %287 = vmatprep.subr.mxu0 0.0
  %288 = vmatpush2.msra.mxu0 0.0
  %289 = vmatprep.subr.mxu0 0.0
  %290 = vmatpush2.msra.mxu0 0.0
  %291 = vmatprep.subr.mxu0 0.0
  %292 = vmatpush2.msra.mxu0 0.0
  %293 = vmatprep.subr.mxu0 0.0
  %294 = vmatpush2.msra.mxu0 0.0
  %295 = vmatprep.subr.mxu0 0.0
  %296 = vmatpush2.msra.mxu0 0.0
  %297 = vmatprep.subr.mxu0 0.0
  %298 = vmatpush2.msra.mxu0 0.0
  %299 = vmatprep.subr.mxu0 0.0
  %300 = vmatpush2.msra.mxu0 0.0
  %301 = vmatprep.subr.mxu0 0.0
  %302 = vmatpush2.msra.mxu0 0.0
  %303 = vmatprep.subr.mxu0 0.0
  %304 = vmatpush2.msra.mxu0 0.0
  %305 = vmatprep.mubr.f32.mxu0 0.0
  %306 = vmatmul.mubr.f32.gmra.mxu0 %v230
  %v307 = vpop.f32.mrf.mxu0
  %v308 = vadd.f32 %v212, %v307
  %v309 = vpop.f32.mrf.mxu0
  %v310 = vadd.f32 %v213, %v309
  %311 = vmatprep.mubr.f32.mxu0 0.0
  %312 = vmatmul.mubr.f32.gmra.mxu0 %v233
  %v313 = vpop.f32.mrf.mxu0
  %v314 = vadd.f32 %v216, %v313
  %v315 = vpop.f32.mrf.mxu0
  %v316 = vadd.f32 %v217, %v315
  %317 = vmatprep.mubr.f32.mxu0 0.0
  %318 = vmatmul.mubr.f32.gmra.mxu0 %v236
  %v319 = vpop.f32.mrf.mxu0
  %v320 = vadd.f32 %v220, %v319
  %v321 = vpop.f32.mrf.mxu0
  %v322 = vadd.f32 %v221, %v321
  %323 = vmatprep.mubr.f32.mxu0 0.0
  %324 = vmatmul.mubr.f32.gmra.mxu0 %v239
  %v325 = vpop.f32.mrf.mxu0
  %v326 = vadd.f32 %v224, %v325
  %v327 = vpop.f32.mrf.mxu0
  %v328 = vadd.f32 %v225, %v327
  %329 = vdwg.mxu0
  %330 = vmatprep.subr.mxu0 0.0
  %331 = vmatpush1.msra.mxu0 0.0
  %332 = vmatprep.subr.mxu0 0.0
  %333 = vmatpush1.msra.mxu0 0.0
  %334 = vmatprep.subr.mxu0 0.0
  %335 = vmatpush1.msra.mxu0 0.0
  %336 = vmatprep.subr.mxu0 0.0
  %337 = vmatpush1.msra.mxu0 0.0
  %338 = vmatprep.subr.mxu0 0.0
  %339 = vmatpush1.msra.mxu0 0.0
  %340 = vmatprep.subr.mxu0 0.0
  %341 = vmatpush1.msra.mxu0 0.0
  %342 = vmatprep.subr.mxu0 0.0
  %343 = vmatpush1.msra.mxu0 0.0
  %344 = vmatprep.subr.mxu0 %v207
  %345 = vmatpush1.msra.mxu0 %v206
  %346 = vmatprep.subr.mxu0 %v203
  %347 = vmatpush1.msra.mxu0 %v202
  %348 = vmatprep.subr.mxu0 %v199
  %349 = vmatpush1.msra.mxu0 %v198
  %350 = vmatprep.subr.mxu0 %v195
  %351 = vmatpush1.msra.mxu0 %v194
  %352 = vmatprep.subr.mxu0 %v191
  %353 = vmatpush1.msra.mxu0 %v190
  %354 = vmatprep.subr.mxu0 %v187
  %355 = vmatpush1.msra.mxu0 %v186
  %356 = vmatprep.subr.mxu0 %v183
  %357 = vmatpush1.msra.mxu0 %v182
  %358 = vmatprep.subr.mxu0 %v179
  %359 = vmatpush1.msra.mxu0 %v178
  %360 = vmatprep.subr.mxu0 %v175
  %361 = vmatpush1.msra.mxu0 %v174
  %362 = vmatprep.subr.mxu0 0.0
  %363 = vmatpush2.msra.mxu0 0.0
  %364 = vmatprep.subr.mxu0 0.0
  %365 = vmatpush2.msra.mxu0 0.0
  %366 = vmatprep.subr.mxu0 0.0
  %367 = vmatpush2.msra.mxu0 0.0
  %368 = vmatprep.subr.mxu0 0.0
  %369 = vmatpush2.msra.mxu0 0.0
  %370 = vmatprep.subr.mxu0 0.0
  %371 = vmatpush2.msra.mxu0 0.0
  %372 = vmatprep.subr.mxu0 0.0
  %373 = vmatpush2.msra.mxu0 0.0
  %374 = vmatprep.subr.mxu0 0.0
  %375 = vmatpush2.msra.mxu0 0.0
  %376 = vmatprep.subr.mxu0 0.0
  %377 = vmatpush2.msra.mxu0 0.0
  %378 = vmatprep.subr.mxu0 0.0
  %379 = vmatpush2.msra.mxu0 0.0
  %380 = vmatprep.subr.mxu0 0.0
  %381 = vmatpush2.msra.mxu0 0.0
  %382 = vmatprep.subr.mxu0 0.0
  %383 = vmatpush2.msra.mxu0 0.0
  %384 = vmatprep.subr.mxu0 0.0
  %385 = vmatpush2.msra.mxu0 0.0
  %386 = vmatprep.subr.mxu0 0.0
  %387 = vmatpush2.msra.mxu0 0.0
  %388 = vmatprep.subr.mxu0 0.0
  %389 = vmatpush2.msra.mxu0 0.0
  %390 = vmatprep.subr.mxu0 0.0
  %391 = vmatpush2.msra.mxu0 0.0
  %392 = vmatprep.subr.mxu0 0.0
  %393 = vmatpush2.msra.mxu0 0.0
  %394 = vmatprep.mubr.f32.mxu0 0.0
  %395 = vmatmul.mubr.f32.gmra.mxu0 %v230
  %v396 = vpop.f32.mrf.mxu0
  %v397 = vadd.f32 %v214, %v396
  %v398 = vpop.f32.mrf.mxu0
  %v399 = vadd.f32 %v215, %v398
  %400 = vmatprep.mubr.f32.mxu0 0.0
  %401 = vmatmul.mubr.f32.gmra.mxu0 %v233
  %v402 = vpop.f32.mrf.mxu0
  %v403 = vadd.f32 %v218, %v402
  %v404 = vpop.f32.mrf.mxu0
  %v405 = vadd.f32 %v219, %v404
  %406 = vmatprep.mubr.f32.mxu0 0.0
  %407 = vmatmul.mubr.f32.gmra.mxu0 %v236
  %v408 = vpop.f32.mrf.mxu0
  %v409 = vadd.f32 %v222, %v408
  %v410 = vpop.f32.mrf.mxu0
  %v411 = vadd.f32 %v223, %v410
  %412 = vmatprep.mubr.f32.mxu0 0.0
  %413 = vmatmul.mubr.f32.gmra.mxu0 %v239
  %v414 = vpop.f32.mrf.mxu0
  %v415 = vadd.f32 %v226, %v414
  %v416 = vpop.f32.mrf.mxu0
  %v417 = vadd.f32 %v227, %v416
  %418 = vdwg.mxu0
  %v419 = vmax.f32 %v308, 0.0
  %v420 = vmax.f32 %v310, 0.0
  %v421 = vmax.f32 %v397, 0.0
  %v422 = vmax.f32 %v399, 0.0
  %v423 = vmax.f32 %v314, 0.0
  %v424 = vmax.f32 %v316, 0.0
  %v425 = vmax.f32 %v403, 0.0
  %v426 = vmax.f32 %v405, 0.0
  %v427 = vmax.f32 %v320, 0.0
  %v428 = vmax.f32 %v322, 0.0
  %v429 = vmax.f32 %v409, 0.0
  %v430 = vmax.f32 %v411, 0.0
  %v431 = vmax.f32 %v326, 0.0
  %v432 = vmax.f32 %v328, 0.0
  %v433 = vmax.f32 %v415, 0.0
  %v434 = vmax.f32 %v417, 0.0
  %v435 = vld [vmem:[%s4] sm:$0xff]
  %v436 = vld [vmem:[%s4 + $0x8] sm:$0xff]
  %v437 = vld [vmem:[%s4 + $0x10] sm:$0xff]
  %v438 = vld [vmem:[%s4 + $0x18] sm:$0xff]
  %v439 = vld [vmem:[%s4 + $0x20] sm:$0xff]
  %v440 = vld [vmem:[%s4 + $0x28] sm:$0xff]
  %v441 = vld [vmem:[%s4 + $0x30] sm:$0xff]
  %v442 = vld [vmem:[%s4 + $0x38] sm:$0xff]
  %443 = vmatprep.subr.mxu0 0.0
  %444 = vmatpush1.xpose.msra.mxu0 0.0
  %445 = vmatprep.subr.mxu0 0.0
  %446 = vmatpush1.xpose.msra.mxu0 0.0
  %447 = vmatprep.subr.mxu0 0.0
  %448 = vmatpush1.xpose.msra.mxu0 0.0
  %449 = vmatprep.subr.mxu0 0.0
  %450 = vmatpush1.xpose.msra.mxu0 0.0
  %451 = vmatprep.subr.mxu0 0.0
  %452 = vmatpush1.xpose.msra.mxu0 0.0
  %453 = vmatprep.subr.mxu0 0.0
  %454 = vmatpush1.xpose.msra.mxu0 0.0
  %455 = vmatprep.subr.mxu0 0.0
  %456 = vmatpush1.xpose.msra.mxu0 0.0
  %457 = vmatprep.subr.mxu0 0.0
  %458 = vmatpush1.xpose.msra.mxu0 0.0
  %459 = vmatprep.subr.mxu0 0.0
  %460 = vmatpush1.xpose.msra.mxu0 0.0
  %461 = vmatprep.subr.mxu0 0.0
  %462 = vmatpush1.xpose.msra.mxu0 0.0
  %463 = vmatprep.subr.mxu0 0.0
  %464 = vmatpush1.xpose.msra.mxu0 0.0
  %465 = vmatprep.subr.mxu0 0.0
  %466 = vmatpush1.xpose.msra.mxu0 0.0
  %467 = vmatprep.subr.mxu0 %v432
  %468 = vmatpush1.xpose.msra.mxu0 %v431
  %469 = vmatprep.subr.mxu0 %v428
  %470 = vmatpush1.xpose.msra.mxu0 %v427
  %471 = vmatprep.subr.mxu0 %v424
  %472 = vmatpush1.xpose.msra.mxu0 %v423
  %473 = vmatprep.subr.mxu0 %v420
  %474 = vmatpush1.xpose.msra.mxu0 %v419
  %475 = vmatprep.subr.mxu0 0.0
  %476 = vmatpush2.xpose.msra.mxu0 0.0
  %477 = vmatprep.subr.mxu0 0.0
  %478 = vmatpush2.xpose.msra.mxu0 0.0
  %479 = vmatprep.subr.mxu0 0.0
  %480 = vmatpush2.xpose.msra.mxu0 0.0
  %481 = vmatprep.subr.mxu0 0.0
  %482 = vmatpush2.xpose.msra.mxu0 0.0
  %483 = vmatprep.subr.mxu0 0.0
  %484 = vmatpush2.xpose.msra.mxu0 0.0
  %485 = vmatprep.subr.mxu0 0.0
  %486 = vmatpush2.xpose.msra.mxu0 0.0
  %487 = vmatprep.subr.mxu0 0.0
  %488 = vmatpush2.xpose.msra.mxu0 0.0
  %489 = vmatprep.subr.mxu0 0.0
  %490 = vmatpush2.xpose.msra.mxu0 0.0
  %491 = vmatprep.subr.mxu0 0.0
  %492 = vmatpush2.xpose.msra.mxu0 0.0
  %493 = vmatprep.subr.mxu0 0.0
  %494 = vmatpush2.xpose.msra.mxu0 0.0
  %495 = vmatprep.subr.mxu0 0.0
  %496 = vmatpush2.xpose.msra.mxu0 0.0
  %497 = vmatprep.subr.mxu0 0.0
  %498 = vmatpush2.xpose.msra.mxu0 0.0
  %499 = vmatprep.subr.mxu0 0.0
  %500 = vmatpush2.xpose.msra.mxu0 0.0
  %501 = vmatprep.subr.mxu0 0.0
  %502 = vmatpush2.xpose.msra.mxu0 0.0
  %503 = vmatprep.subr.mxu0 0.0
  %504 = vmatpush2.xpose.msra.mxu0 0.0
  %505 = vmatprep.subr.mxu0 0.0
  %506 = vmatpush2.xpose.msra.mxu0 0.0
  %507 = vmatprep.mubr.f32.mxu0 %v436
  %508 = vmatmul.mubr.f32.gmra.mxu0 %v435
  %v509 = vpop.f32.mrf.mxu0
  %v510 = vadd.f32 0.0, %v509
  %v511 = vpop.f32.mrf.mxu0
  %512 = vmatprep.mubr.f32.mxu0 %v440
  %513 = vmatmul.mubr.f32.gmra.mxu0 %v439
  %v514 = vpop.f32.mrf.mxu0
  %v515 = vadd.f32 0.0, %v514
  %v516 = vpop.f32.mrf.mxu0
  %517 = vdwg.mxu0
  %518 = vmatprep.subr.mxu0 0.0
  %519 = vmatpush1.xpose.msra.mxu0 0.0
  %520 = vmatprep.subr.mxu0 0.0
  %521 = vmatpush1.xpose.msra.mxu0 0.0
  %522 = vmatprep.subr.mxu0 0.0
  %523 = vmatpush1.xpose.msra.mxu0 0.0
  %524 = vmatprep.subr.mxu0 0.0
  %525 = vmatpush1.xpose.msra.mxu0 0.0
  %526 = vmatprep.subr.mxu0 0.0
  %527 = vmatpush1.xpose.msra.mxu0 0.0
  %528 = vmatprep.subr.mxu0 0.0
  %529 = vmatpush1.xpose.msra.mxu0 0.0
  %530 = vmatprep.subr.mxu0 0.0
  %531 = vmatpush1.xpose.msra.mxu0 0.0
  %532 = vmatprep.subr.mxu0 0.0
  %533 = vmatpush1.xpose.msra.mxu0 0.0
  %534 = vmatprep.subr.mxu0 0.0
  %535 = vmatpush1.xpose.msra.mxu0 0.0
  %536 = vmatprep.subr.mxu0 0.0
  %537 = vmatpush1.xpose.msra.mxu0 0.0
  %538 = vmatprep.subr.mxu0 0.0
  %539 = vmatpush1.xpose.msra.mxu0 0.0
  %540 = vmatprep.subr.mxu0 0.0
  %541 = vmatpush1.xpose.msra.mxu0 0.0
  %542 = vmatprep.subr.mxu0 %v434
  %543 = vmatpush1.xpose.msra.mxu0 %v433
  %544 = vmatprep.subr.mxu0 %v430
  %545 = vmatpush1.xpose.msra.mxu0 %v429
  %546 = vmatprep.subr.mxu0 %v426
  %547 = vmatpush1.xpose.msra.mxu0 %v425
  %548 = vmatprep.subr.mxu0 %v422
  %549 = vmatpush1.xpose.msra.mxu0 %v421
  %550 = vmatprep.subr.mxu0 0.0
  %551 = vmatpush2.xpose.msra.mxu0 0.0
  %552 = vmatprep.subr.mxu0 0.0
  %553 = vmatpush2.xpose.msra.mxu0 0.0
  %554 = vmatprep.subr.mxu0 0.0
  %555 = vmatpush2.xpose.msra.mxu0 0.0
  %556 = vmatprep.subr.mxu0 0.0
  %557 = vmatpush2.xpose.msra.mxu0 0.0
  %558 = vmatprep.subr.mxu0 0.0
  %559 = vmatpush2.xpose.msra.mxu0 0.0
  %560 = vmatprep.subr.mxu0 0.0
  %561 = vmatpush2.xpose.msra.mxu0 0.0
  %562 = vmatprep.subr.mxu0 0.0
  %563 = vmatpush2.xpose.msra.mxu0 0.0
  %564 = vmatprep.subr.mxu0 0.0
  %565 = vmatpush2.xpose.msra.mxu0 0.0
  %566 = vmatprep.subr.mxu0 0.0
  %567 = vmatpush2.xpose.msra.mxu0 0.0
  %568 = vmatprep.subr.mxu0 0.0
  %569 = vmatpush2.xpose.msra.mxu0 0.0
  %570 = vmatprep.subr.mxu0 0.0
  %571 = vmatpush2.xpose.msra.mxu0 0.0
  %572 = vmatprep.subr.mxu0 0.0
  %573 = vmatpush2.xpose.msra.mxu0 0.0
  %574 = vmatprep.subr.mxu0 0.0
  %575 = vmatpush2.xpose.msra.mxu0 0.0
  %576 = vmatprep.subr.mxu0 0.0
  %577 = vmatpush2.xpose.msra.mxu0 0.0
  %578 = vmatprep.subr.mxu0 0.0
  %579 = vmatpush2.xpose.msra.mxu0 0.0
  %580 = vmatprep.subr.mxu0 0.0
  %581 = vmatpush2.xpose.msra.mxu0 0.0
  %582 = vmatprep.mubr.f32.mxu0 %v438
  %583 = vmatmul.mubr.f32.gmra.mxu0 %v437
  %v584 = vpop.f32.mrf.mxu0
  %v585 = vadd.f32 %v510, %v584
  %v586 = vpop.f32.mrf.mxu0
  %587 = vmatprep.mubr.f32.mxu0 %v442
  %588 = vmatmul.mubr.f32.gmra.mxu0 %v441
  %v589 = vpop.f32.mrf.mxu0
  %v590 = vadd.f32 %v515, %v589
  %v591 = vpop.f32.mrf.mxu0
  %592 = vdwg.mxu0
  %v593 = vld [vmem:[%s5] sm:$0xff]
  %v594 = vld [vmem:[%s5 + $0x8] sm:$0xff]
  %v595 = vld [vmem:[%s5 + $0x10] sm:$0xff]
  %v596 = vld [vmem:[%s5 + $0x18] sm:$0xff]
  %v597 = vld [vmem:[%s5 + $0x20] sm:$0xff]
  %v598 = vld [vmem:[%s5 + $0x28] sm:$0xff]
  %v599 = vld [vmem:[%s5 + $0x30] sm:$0xff]
  %v600 = vld [vmem:[%s5 + $0x38] sm:$0xff]
  %v601 = vld [vmem:[%s5 + $0x40] sm:$0xff]
  %v602 = vld [vmem:[%s5 + $0x48] sm:$0xff]
  %v603 = vld [vmem:[%s5 + $0x50] sm:$0xff]
  %v604 = vld [vmem:[%s5 + $0x58] sm:$0xff]
  %v605 = vld [vmem:[%s6] sm:$0x7]
  %v607 = vlaneseq
  %v608 = vshrl.u32 %v607, 7
  %v609 = vsub.s32 0, %v608
  %v610 = vrot.slane %v605, %v609
  %v611 = vlaneseq
  %v612 = vshrl.u32 %v611, 7
  %v613 = vsub.s32 1, %v612
  %v614 = vrot.slane %v605, %v613
  %v615 = vlaneseq
  %v616 = vshrl.u32 %v615, 7
  %v617 = vsub.s32 2, %v616
  %v618 = vrot.slane %v605, %v617
  %vm622 = vcmask 261120
  %v624 = vsel %vm622, %v585, 0
  %626 = vmatprep.subr.mxu0 0.0
  %627 = vmatpush1.msra.mxu0 0.0
  %628 = vmatprep.subr.mxu0 0.0
  %629 = vmatpush1.msra.mxu0 0.0
  %630 = vmatprep.subr.mxu0 0.0
  %631 = vmatpush1.msra.mxu0 0.0
  %632 = vmatprep.subr.mxu0 0.0
  %633 = vmatpush1.msra.mxu0 0.0
  %634 = vmatprep.subr.mxu0 0.0
  %635 = vmatpush1.msra.mxu0 0.0
  %636 = vmatprep.subr.mxu0 0.0
  %637 = vmatpush1.msra.mxu0 0.0
  %638 = vmatprep.subr.mxu0 0.0
  %639 = vmatpush1.msra.mxu0 0.0
  %640 = vmatprep.subr.mxu0 0.0
  %641 = vmatpush1.msra.mxu0 0.0
  %642 = vmatprep.subr.mxu0 0.0
  %643 = vmatpush1.msra.mxu0 0.0
  %644 = vmatprep.subr.mxu0 0.0
  %645 = vmatpush1.msra.mxu0 0.0
  %646 = vmatprep.subr.mxu0 0.0
  %647 = vmatpush1.msra.mxu0 0.0
  %648 = vmatprep.subr.mxu0 0.0
  %649 = vmatpush1.msra.mxu0 0.0
  %650 = vmatprep.subr.mxu0 %v603
  %651 = vmatpush1.msra.mxu0 %v602
  %652 = vmatprep.subr.mxu0 %v600
  %653 = vmatpush1.msra.mxu0 %v599
  %654 = vmatprep.subr.mxu0 %v597
  %655 = vmatpush1.msra.mxu0 %v596
  %656 = vmatprep.subr.mxu0 %v594
  %657 = vmatpush1.msra.mxu0 %v593
  %658 = vmatprep.subr.mxu0 0.0
  %659 = vmatpush2.msra.mxu0 0.0
  %660 = vmatprep.subr.mxu0 0.0
  %661 = vmatpush2.msra.mxu0 0.0
  %662 = vmatprep.subr.mxu0 0.0
  %663 = vmatpush2.msra.mxu0 0.0
  %664 = vmatprep.subr.mxu0 0.0
  %665 = vmatpush2.msra.mxu0 0.0
  %666 = vmatprep.subr.mxu0 0.0
  %667 = vmatpush2.msra.mxu0 0.0
  %668 = vmatprep.subr.mxu0 0.0
  %669 = vmatpush2.msra.mxu0 0.0
  %670 = vmatprep.subr.mxu0 0.0
  %671 = vmatpush2.msra.mxu0 0.0
  %672 = vmatprep.subr.mxu0 0.0
  %673 = vmatpush2.msra.mxu0 0.0
  %674 = vmatprep.subr.mxu0 0.0
  %675 = vmatpush2.msra.mxu0 0.0
  %676 = vmatprep.subr.mxu0 0.0
  %677 = vmatpush2.msra.mxu0 0.0
  %678 = vmatprep.subr.mxu0 0.0
  %679 = vmatpush2.msra.mxu0 0.0
  %680 = vmatprep.subr.mxu0 0.0
  %681 = vmatpush2.msra.mxu0 0.0
  %682 = vmatprep.subr.mxu0 0.0
  %683 = vmatpush2.msra.mxu0 0.0
  %684 = vmatprep.subr.mxu0 0.0
  %685 = vmatpush2.msra.mxu0 0.0
  %686 = vmatprep.subr.mxu0 0.0
  %687 = vmatpush2.msra.mxu0 0.0
  %688 = vmatprep.subr.mxu0 0.0
  %689 = vmatpush2.msra.mxu0 0.0
  %690 = vmatprep.mubr.f32.mxu0 0.0
  %691 = vmatmul.mubr.f32.gmra.mxu0 %v624
  %v692 = vpop.f32.mrf.mxu0
  %v693 = vadd.f32 %v610, %v692
  %v694 = vpop.f32.mrf.mxu0
  %v695 = vadd.f32 %v614, %v694
  %696 = vdwg.mxu0
  %697 = vmatprep.subr.mxu0 0.0
  %698 = vmatpush1.msra.mxu0 0.0
  %699 = vmatprep.subr.mxu0 0.0
  %700 = vmatpush1.msra.mxu0 0.0
  %701 = vmatprep.subr.mxu0 0.0
  %702 = vmatpush1.msra.mxu0 0.0
  %703 = vmatprep.subr.mxu0 0.0
  %704 = vmatpush1.msra.mxu0 0.0
  %705 = vmatprep.subr.mxu0 0.0
  %706 = vmatpush1.msra.mxu0 0.0
  %707 = vmatprep.subr.mxu0 0.0
  %708 = vmatpush1.msra.mxu0 0.0
  %709 = vmatprep.subr.mxu0 0.0
  %710 = vmatpush1.msra.mxu0 0.0
  %711 = vmatprep.subr.mxu0 0.0
  %712 = vmatpush1.msra.mxu0 0.0
  %713 = vmatprep.subr.mxu0 0.0
  %714 = vmatpush1.msra.mxu0 0.0
  %715 = vmatprep.subr.mxu0 0.0
  %716 = vmatpush1.msra.mxu0 0.0
  %717 = vmatprep.subr.mxu0 0.0
  %718 = vmatpush1.msra.mxu0 0.0
  %719 = vmatprep.subr.mxu0 0.0
  %720 = vmatpush1.msra.mxu0 0.0
  %721 = vmatprep.subr.mxu0 0.0
  %722 = vmatpush1.msra.mxu0 %v604
  %723 = vmatprep.subr.mxu0 0.0
  %724 = vmatpush1.msra.mxu0 %v601
  %725 = vmatprep.subr.mxu0 0.0
  %726 = vmatpush1.msra.mxu0 %v598
  %727 = vmatprep.subr.mxu0 0.0
  %728 = vmatpush1.msra.mxu0 %v595
  %729 = vmatprep.subr.mxu0 0.0
  %730 = vmatpush2.msra.mxu0 0.0
  %731 = vmatprep.subr.mxu0 0.0
  %732 = vmatpush2.msra.mxu0 0.0
  %733 = vmatprep.subr.mxu0 0.0
  %734 = vmatpush2.msra.mxu0 0.0
  %735 = vmatprep.subr.mxu0 0.0
  %736 = vmatpush2.msra.mxu0 0.0
  %737 = vmatprep.subr.mxu0 0.0
  %738 = vmatpush2.msra.mxu0 0.0
  %739 = vmatprep.subr.mxu0 0.0
  %740 = vmatpush2.msra.mxu0 0.0
  %741 = vmatprep.subr.mxu0 0.0
  %742 = vmatpush2.msra.mxu0 0.0
  %743 = vmatprep.subr.mxu0 0.0
  %744 = vmatpush2.msra.mxu0 0.0
  %745 = vmatprep.subr.mxu0 0.0
  %746 = vmatpush2.msra.mxu0 0.0
  %747 = vmatprep.subr.mxu0 0.0
  %748 = vmatpush2.msra.mxu0 0.0
  %749 = vmatprep.subr.mxu0 0.0
  %750 = vmatpush2.msra.mxu0 0.0
  %751 = vmatprep.subr.mxu0 0.0
  %752 = vmatpush2.msra.mxu0 0.0
  %753 = vmatprep.subr.mxu0 0.0
  %754 = vmatpush2.msra.mxu0 0.0
  %755 = vmatprep.subr.mxu0 0.0
  %756 = vmatpush2.msra.mxu0 0.0
  %757 = vmatprep.subr.mxu0 0.0
  %758 = vmatpush2.msra.mxu0 0.0
  %759 = vmatprep.subr.mxu0 0.0
  %760 = vmatpush2.msra.mxu0 0.0
  %761 = vmatprep.mubr.f32.mxu0 0.0
  %762 = vmatmul.mubr.f32.gmra.mxu0 %v624
  %v763 = vpop.f32.mrf.mxu0
  %v764 = vadd.f32 %v618, %v763
  %v765 = vpop.f32.mrf.mxu0
  %766 = vdwg.mxu0
  %767 = vmax.xlane.f32.xlu0 %v693
  %v768 = vpop.xlane.xlu0 %767
  %v769 = vsub.f32 %v693, %v768
  %v770 = vmul.f32 %v769, 1.442695
  %v771 = vpow.pop %v770
  %772 = vadd.xlane.f32.xlu0 %v771
  %v773 = vpop.xlane.xlu0 %772
  %v774 = vrcp.pop %v773
  %v775 = vmul.f32 %v771, %v774
  %v776 = vrot.slane %v695, 4
  %v777 = vmax.f32 %v695, %v776
  %v778 = vrot.slane %v777, 2
  %v779 = vmax.f32 %v777, %v778
  %v780 = vrot.slane %v779, 1
  %v781 = vmax.f32 %v779, %v780
  %v782 = vsub.f32 %v695, %v781
  %v783 = vmul.f32 %v782, 1.442695
  %v784 = vpow.pop %v783
  %v785 = vrot.slane %v784, 4
  %v786 = vadd.f32 %v784, %v785
  %v787 = vrot.slane %v786, 2
  %v788 = vadd.f32 %v786, %v787
  %v789 = vrot.slane %v788, 1
  %v790 = vadd.f32 %v788, %v789
  %v791 = vrcp.pop %v790
  %v792 = vmul.f32 %v784, %v791
  %v793 = vmul.f32 %v775, %v792
  %v794 = vrot.slane %v793, 4
  %v795 = vadd.f32 %v793, %v794
  %v796 = vrot.slane %v795, 2
  %v797 = vadd.f32 %v795, %v796
  %v798 = vrot.slane %v797, 1
  %v799 = vadd.f32 %v797, %v798
  %800 = vst [vmem:[%s7] sm:$0xff] %v793
  %801 = vst [vmem:[%s7 + $0x10] sm:$0xff] %v764
  %802 = vst [vmem:[%s7 + $0x20] sm:$0x1] %v799
  %v804 = vsel %vm622, %v590, 0
  %806 = vmatprep.subr.mxu0 0.0
  %807 = vmatpush1.msra.mxu0 0.0
  %808 = vmatprep.subr.mxu0 0.0
  %809 = vmatpush1.msra.mxu0 0.0
  %810 = vmatprep.subr.mxu0 0.0
  %811 = vmatpush1.msra.mxu0 0.0
  %812 = vmatprep.subr.mxu0 0.0
  %813 = vmatpush1.msra.mxu0 0.0
  %814 = vmatprep.subr.mxu0 0.0
  %815 = vmatpush1.msra.mxu0 0.0
  %816 = vmatprep.subr.mxu0 0.0
  %817 = vmatpush1.msra.mxu0 0.0
  %818 = vmatprep.subr.mxu0 0.0
  %819 = vmatpush1.msra.mxu0 0.0
  %820 = vmatprep.subr.mxu0 0.0
  %821 = vmatpush1.msra.mxu0 0.0
  %822 = vmatprep.subr.mxu0 0.0
  %823 = vmatpush1.msra.mxu0 0.0
  %824 = vmatprep.subr.mxu0 0.0
  %825 = vmatpush1.msra.mxu0 0.0
  %826 = vmatprep.subr.mxu0 0.0
  %827 = vmatpush1.msra.mxu0 0.0
  %828 = vmatprep.subr.mxu0 0.0
  %829 = vmatpush1.msra.mxu0 0.0
  %830 = vmatprep.subr.mxu0 %v603
  %831 = vmatpush1.msra.mxu0 %v602
  %832 = vmatprep.subr.mxu0 %v600
  %833 = vmatpush1.msra.mxu0 %v599
  %834 = vmatprep.subr.mxu0 %v597
  %835 = vmatpush1.msra.mxu0 %v596
  %836 = vmatprep.subr.mxu0 %v594
  %837 = vmatpush1.msra.mxu0 %v593
  %838 = vmatprep.subr.mxu0 0.0
  %839 = vmatpush2.msra.mxu0 0.0
  %840 = vmatprep.subr.mxu0 0.0
  %841 = vmatpush2.msra.mxu0 0.0
  %842 = vmatprep.subr.mxu0 0.0
  %843 = vmatpush2.msra.mxu0 0.0
  %844 = vmatprep.subr.mxu0 0.0
  %845 = vmatpush2.msra.mxu0 0.0
  %846 = vmatprep.subr.mxu0 0.0
  %847 = vmatpush2.msra.mxu0 0.0
  %848 = vmatprep.subr.mxu0 0.0
  %849 = vmatpush2.msra.mxu0 0.0
  %850 = vmatprep.subr.mxu0 0.0
  %851 = vmatpush2.msra.mxu0 0.0
  %852 = vmatprep.subr.mxu0 0.0
  %853 = vmatpush2.msra.mxu0 0.0
  %854 = vmatprep.subr.mxu0 0.0
  %855 = vmatpush2.msra.mxu0 0.0
  %856 = vmatprep.subr.mxu0 0.0
  %857 = vmatpush2.msra.mxu0 0.0
  %858 = vmatprep.subr.mxu0 0.0
  %859 = vmatpush2.msra.mxu0 0.0
  %860 = vmatprep.subr.mxu0 0.0
  %861 = vmatpush2.msra.mxu0 0.0
  %862 = vmatprep.subr.mxu0 0.0
  %863 = vmatpush2.msra.mxu0 0.0
  %864 = vmatprep.subr.mxu0 0.0
  %865 = vmatpush2.msra.mxu0 0.0
  %866 = vmatprep.subr.mxu0 0.0
  %867 = vmatpush2.msra.mxu0 0.0
  %868 = vmatprep.subr.mxu0 0.0
  %869 = vmatpush2.msra.mxu0 0.0
  %870 = vmatprep.mubr.f32.mxu0 0.0
  %871 = vmatmul.mubr.f32.gmra.mxu0 %v804
  %v872 = vpop.f32.mrf.mxu0
  %v873 = vadd.f32 %v610, %v872
  %v874 = vpop.f32.mrf.mxu0
  %v875 = vadd.f32 %v614, %v874
  %876 = vdwg.mxu0
  %877 = vmatprep.subr.mxu0 0.0
  %878 = vmatpush1.msra.mxu0 0.0
  %879 = vmatprep.subr.mxu0 0.0
  %880 = vmatpush1.msra.mxu0 0.0
  %881 = vmatprep.subr.mxu0 0.0
  %882 = vmatpush1.msra.mxu0 0.0
  %883 = vmatprep.subr.mxu0 0.0
  %884 = vmatpush1.msra.mxu0 0.0
  %885 = vmatprep.subr.mxu0 0.0
  %886 = vmatpush1.msra.mxu0 0.0
  %887 = vmatprep.subr.mxu0 0.0
  %888 = vmatpush1.msra.mxu0 0.0
  %889 = vmatprep.subr.mxu0 0.0
  %890 = vmatpush1.msra.mxu0 0.0
  %891 = vmatprep.subr.mxu0 0.0
  %892 = vmatpush1.msra.mxu0 0.0
  %893 = vmatprep.subr.mxu0 0.0
  %894 = vmatpush1.msra.mxu0 0.0
  %895 = vmatprep.subr.mxu0 0.0
  %896 = vmatpush1.msra.mxu0 0.0
  %897 = vmatprep.subr.mxu0 0.0
  %898 = vmatpush1.msra.mxu0 0.0
  %899 = vmatprep.subr.mxu0 0.0
  %900 = vmatpush1.msra.mxu0 0.0
  %901 = vmatprep.subr.mxu0 0.0
  %902 = vmatpush1.msra.mxu0 %v604
  %903 = vmatprep.subr.mxu0 0.0
  %904 = vmatpush1.msra.mxu0 %v601
  %905 = vmatprep.subr.mxu0 0.0
  %906 = vmatpush1.msra.mxu0 %v598
  %907 = vmatprep.subr.mxu0 0.0
  %908 = vmatpush1.msra.mxu0 %v595
  %909 = vmatprep.subr.mxu0 0.0
  %910 = vmatpush2.msra.mxu0 0.0
  %911 = vmatprep.subr.mxu0 0.0
  %912 = vmatpush2.msra.mxu0 0.0
  %913 = vmatprep.subr.mxu0 0.0
  %914 = vmatpush2.msra.mxu0 0.0
  %915 = vmatprep.subr.mxu0 0.0
  %916 = vmatpush2.msra.mxu0 0.0
  %917 = vmatprep.subr.mxu0 0.0
  %918 = vmatpush2.msra.mxu0 0.0
  %919 = vmatprep.subr.mxu0 0.0
  %920 = vmatpush2.msra.mxu0 0.0
  %921 = vmatprep.subr.mxu0 0.0
  %922 = vmatpush2.msra.mxu0 0.0
  %923 = vmatprep.subr.mxu0 0.0
  %924 = vmatpush2.msra.mxu0 0.0
  %925 = vmatprep.subr.mxu0 0.0
  %926 = vmatpush2.msra.mxu0 0.0
  %927 = vmatprep.subr.mxu0 0.0
  %928 = vmatpush2.msra.mxu0 0.0
  %929 = vmatprep.subr.mxu0 0.0
  %930 = vmatpush2.msra.mxu0 0.0
  %931 = vmatprep.subr.mxu0 0.0
  %932 = vmatpush2.msra.mxu0 0.0
  %933 = vmatprep.subr.mxu0 0.0
  %934 = vmatpush2.msra.mxu0 0.0
  %935 = vmatprep.subr.mxu0 0.0
  %936 = vmatpush2.msra.mxu0 0.0
  %937 = vmatprep.subr.mxu0 0.0
  %938 = vmatpush2.msra.mxu0 0.0
  %939 = vmatprep.subr.mxu0 0.0
  %940 = vmatpush2.msra.mxu0 0.0
  %941 = vmatprep.mubr.f32.mxu0 0.0
  %942 = vmatmul.mubr.f32.gmra.mxu0 %v804
  %v943 = vpop.f32.mrf.mxu0
  %v944 = vadd.f32 %v618, %v943
  %v945 = vpop.f32.mrf.mxu0
  %946 = vdwg.mxu0
  %947 = vmax.xlane.f32.xlu0 %v873
  %v948 = vpop.xlane.xlu0 %947
  %v949 = vsub.f32 %v873, %v948
  %v950 = vmul.f32 %v949, 1.442695
  %v951 = vpow.pop %v950
  %952 = vadd.xlane.f32.xlu0 %v951
  %v953 = vpop.xlane.xlu0 %952
  %v954 = vrcp.pop %v953
  %v955 = vmul.f32 %v951, %v954
  %v956 = vrot.slane %v875, 4
  %v957 = vmax.f32 %v875, %v956
  %v958 = vrot.slane %v957, 2
  %v959 = vmax.f32 %v957, %v958
  %v960 = vrot.slane %v959, 1
  %v961 = vmax.f32 %v959, %v960
  %v962 = vsub.f32 %v875, %v961
  %v963 = vmul.f32 %v962, 1.442695
  %v964 = vpow.pop %v963
  %v965 = vrot.slane %v964, 4
  %v966 = vadd.f32 %v964, %v965
  %v967 = vrot.slane %v966, 2
  %v968 = vadd.f32 %v966, %v967
  %v969 = vrot.slane %v968, 1
  %v970 = vadd.f32 %v968, %v969
  %v971 = vrcp.pop %v970
  %v972 = vmul.f32 %v964, %v971
  %v973 = vmul.f32 %v955, %v972
  %v974 = vrot.slane %v973, 4
  %v975 = vadd.f32 %v973, %v974
  %v976 = vrot.slane %v975, 2
  %v977 = vadd.f32 %v975, %v976
  %v978 = vrot.slane %v977, 1
  %v979 = vadd.f32 %v977, %v978
  %980 = vst [vmem:[%s7 + $0x8] sm:$0xff] %v973
  %981 = vst [vmem:[%s7 + $0x18] sm:$0xff] %v944
  %982 = vst [vmem:[%s7 + $0x21] sm:$0x1] %v979
  // Predicated region
  $region30: #{generalized_rcnn_wsl_forward.1} parent=0 // pred_check
    _
  $region31: #{generalized_rcnn_wsl_forward.1} parent=0 // pred_check_branch
    %984 = sbr.rel (0) target = $region33
  $region32: #{generalized_rcnn_wsl_forward.1} parent=0 // pred_region
    _
  $region33: #{generalized_rcnn_wsl_forward.1} parent=0 // pred_fallthru
    _
  // Predicated region
  $region34: #{generalized_rcnn_wsl_forward.1} parent=0 // pred_check
    _
  $region35: #{generalized_rcnn_wsl_forward.1} parent=0 // pred_check_branch
    %986 = sbr.rel (0) target = $region37
  $region36: #{generalized_rcnn_wsl_forward.1} parent=0 // pred_region
    _
  $region37: #{generalized_rcnn_wsl_forward.1} parent=0 // pred_fallthru
    _

</llo_original>
